<compile_context>
chip_gen: v7x
topology: tpu7x:2x2x1
jax: 0.10.0
libtpu: 0.0.40
codegen_flags: <defaults>
</compile_context>

<pallas_src>
import jax
import jax.numpy as jnp
from jax.experimental import pallas as pl
from jax.experimental.pallas import tpu as pltpu

EPS = 1e-6

# VMEM budget for the pipelined blocks:
#   total ~= 2 (double buffer) * 2 (in + out) * block_bytes <= _VMEM_BUDGET
# 8 MiB total -> 2 MiB per block buffer.  Safe on v5e/v6e/v7x defaults.
_VMEM_BUDGET_BYTES = 8 * 1024 * 1024
_BLOCK_BYTES = _VMEM_BUDGET_BYTES // 4


def layernorm_kernel(x_ref, w_ref, b_ref, o_ref):
    # x_ref / o_ref: (Nb, C, T) tile.  w_ref / b_ref: (C, 1) resident affine
    # params, broadcast over the batch-block and lane axes.
    x = x_ref[...].astype(jnp.float32)
    # Two-pass statistics over the channel (sublane) axis — matches the
    # PyTorch reference ((x - u)^2 form, biased variance).
    u = jnp.mean(x, axis=1, keepdims=True)
    d = x - u
    var = jnp.mean(d * d, axis=1, keepdims=True)
    inv = jax.lax.rsqrt(var + EPS)
    y = w_ref[...] * (d * inv) + b_ref[...]
    o_ref[...] = y.astype(o_ref.dtype)


def _choose_blocks(N, C, HW):
    """Pick (batch_block, lane_tile) so one block covers as much as fits."""
    elem_bytes = 4  # statistics computed in f32
    max_elems = max(_BLOCK_BYTES // elem_bytes, C * 128)

    if C * HW <= max_elems:
        # Whole spatial row fits: full-dim lane block (always legal, no masked
        # tail), and fold several batch elements into the same block to
        # amortize per-grid-step overhead over a bigger contiguous DMA.
        lane_tile = HW
        nb = max(1, min(N, max_elems // (C * HW)))
    else:
        # Large spatial extent: big lane tiles (multiple of 128), one batch
        # element per block, masked tail via pl.cdiv.
        lane_tile = max(128, ((max_elems // C) // 128) * 128)
        nb = 1
    return nb, lane_tile


def layer_norm_nchw(x, weight, bias):
    """x: (N, C, H, W). weight/bias: (1, C, 1, 1). Normalizes over C."""
    N, C, H, W = x.shape
    HW = H * W

    # Free view: NCHW -> (N, C, H*W).  No transpose, no extra HBM traffic.
    x3 = x.reshape(N, C, HW)
    w_c = weight.reshape(C, 1).astype(jnp.float32)
    b_c = bias.reshape(C, 1).astype(jnp.float32)

    nb, lane_tile = _choose_blocks(N, C, HW)
    grid = (pl.cdiv(N, nb), pl.cdiv(HW, lane_tile))
    # For the shipped 2x7x256 shape this is grid = (1, 1): one block, one DMA.

    out3 = pl.pallas_call(
        layernorm_kernel,
        out_shape=jax.ShapeDtypeStruct((N, C, HW), x.dtype),
        grid_spec=pltpu.PrefetchScalarGridSpec(
            num_scalar_prefetch=0,
            grid=grid,
            in_specs=[
                pl.BlockSpec((nb, C, lane_tile),
                             lambda n, t: (n, 0, t)),            # x block
                pl.BlockSpec((C, 1), lambda n, t: (0, 0)),       # weight (resident)
                pl.BlockSpec((C, 1), lambda n, t: (0, 0)),       # bias (resident)
            ],
            out_specs=pl.BlockSpec((nb, C, lane_tile),
                                   lambda n, t: (n, 0, t)),
        ),
        compiler_params=pltpu.CompilerParams(
            # Every output column is independent; both axes can shard freely
            # (only matters on multi-TC parts when the grid is larger than 1).
            dimension_semantics=("parallel", "parallel"),
        ),
    )(x3, w_c, b_c)

    # Free view back to NCHW.
    return out3.reshape(N, C, H, W)


def layer_norm_ref(x, weight, bias):
    u = jnp.mean(x, axis=1, keepdims=True)
    s = jnp.mean((x - u) ** 2, axis=1, keepdims=True)
    return weight * ((x - u) / jnp.sqrt(s + EPS)) + bias


if __name__ == "__main__":
    key = jax.random.PRNGKey(0)
    N, C, H, W = 2, 7, 16, 16            # matches default param shape (1, 7, 1, 1)
    x = jax.random.normal(key, (N, C, H, W), dtype=jnp.float32)

    # Same init as nn.Parameter(torch.ones/zeros(shape)).
    weight = jnp.ones((1, C, 1, 1), dtype=jnp.float32)
    bias = jnp.zeros((1, C, 1, 1), dtype=jnp.float32)

    out = layer_norm_nchw(x, weight, bias)
    out = jax.block_until_ready(out)

    ref = layer_norm_ref(x, weight, bias)
    assert out.shape == (N, C, H, W)
    assert jnp.allclose(out, ref, atol=1e-5, rtol=1e-5)

    print("KERNEL_OK")
</pallas_src>

<mosaic_0001>
module attributes {stable_mosaic.version = 11 : i64} {
  func.func @layernorm_kernel(%arg0: i32, %arg1: i32, %arg2: memref<2x7x256xf32, #tpu.memory_space<vmem>>, %arg3: memref<7x1xf32, #tpu.memory_space<vmem>>, %arg4: memref<7x1xf32, #tpu.memory_space<vmem>>, %arg5: memref<2x7x256xf32, #tpu.memory_space<vmem>>) attributes {dimension_semantics = [#tpu.dimension_semantics<parallel>, #tpu.dimension_semantics<parallel>], iteration_bounds = array<i64: 1, 1>, scalar_prefetch = 0 : i64, scratch_operands = 0 : i64, tpu.core_type = #tpu.core_type<tc>, window_params = [{transform_indices = @transform_0, window_bounds = array<i64: 2, 7, 256>}, {pipeline_mode = #tpu.pipeline_mode<synchronous>, transform_indices = @transform_1, window_bounds = array<i64: 7, 1>}, {pipeline_mode = #tpu.pipeline_mode<synchronous>, transform_indices = @transform_2, window_bounds = array<i64: 7, 1>}, {transform_indices = @transform_3, window_bounds = array<i64: 2, 7, 256>}]} {
    %c0 = arith.constant 0 : index
    %c0_0 = arith.constant 0 : index
    %c0_1 = arith.constant 0 : index
    %0 = vector.load %arg2[%c0, %c0_0, %c0_1] : memref<2x7x256xf32, #tpu.memory_space<vmem>>, vector<2x7x256xf32>
    %cst = arith.constant dense<0.000000e+00> : vector<2x256xf32>
    %1 = vector.multi_reduction <add>, %0, %cst [1] : vector<2x7x256xf32> to vector<2x256xf32>
    %2 = vector.shape_cast %1 : vector<2x256xf32> to vector<2x1x256xf32>
    %cst_2 = arith.constant 7.000000e+00 : f32
    %3 = vector.broadcast %cst_2 : f32 to vector<2x1x256xf32>
    %4 = arith.divf %2, %3 : vector<2x1x256xf32>
    %5 = vector.broadcast %4 : vector<2x1x256xf32> to vector<2x7x256xf32>
    %6 = arith.subf %0, %5 : vector<2x7x256xf32>
    %7 = arith.mulf %6, %6 : vector<2x7x256xf32>
    %cst_3 = arith.constant dense<0.000000e+00> : vector<2x256xf32>
    %8 = vector.multi_reduction <add>, %7, %cst_3 [1] : vector<2x7x256xf32> to vector<2x256xf32>
    %9 = vector.shape_cast %8 : vector<2x256xf32> to vector<2x1x256xf32>
    %cst_4 = arith.constant 7.000000e+00 : f32
    %10 = vector.broadcast %cst_4 : f32 to vector<2x1x256xf32>
    %11 = arith.divf %9, %10 : vector<2x1x256xf32>
    %cst_5 = arith.constant 9.99999997E-7 : f32
    %12 = vector.broadcast %cst_5 : f32 to vector<2x1x256xf32>
    %13 = arith.addf %11, %12 : vector<2x1x256xf32>
    %14 = math.rsqrt %13 : vector<2x1x256xf32>
    %c0_6 = arith.constant 0 : index
    %c0_7 = arith.constant 0 : index
    %15 = vector.load %arg3[%c0_6, %c0_7] : memref<7x1xf32, #tpu.memory_space<vmem>>, vector<7x1xf32>
    %16 = vector.broadcast %14 : vector<2x1x256xf32> to vector<2x7x256xf32>
    %17 = arith.mulf %6, %16 : vector<2x7x256xf32>
    %18 = vector.shape_cast %15 : vector<7x1xf32> to vector<1x7x1xf32>
    %19 = vector.broadcast %18 : vector<1x7x1xf32> to vector<2x7x256xf32>
    %20 = arith.mulf %19, %17 : vector<2x7x256xf32>
    %c0_8 = arith.constant 0 : index
    %c0_9 = arith.constant 0 : index
    %21 = vector.load %arg4[%c0_8, %c0_9] : memref<7x1xf32, #tpu.memory_space<vmem>>, vector<7x1xf32>
    %22 = vector.shape_cast %21 : vector<7x1xf32> to vector<1x7x1xf32>
    %23 = vector.broadcast %22 : vector<1x7x1xf32> to vector<2x7x256xf32>
    %24 = arith.addf %20, %23 : vector<2x7x256xf32>
    %c0_10 = arith.constant 0 : index
    %c0_11 = arith.constant 0 : index
    %c0_12 = arith.constant 0 : index
    %25 = vector.load %arg5[%c0_10, %c0_11, %c0_12] : memref<2x7x256xf32, #tpu.memory_space<vmem>>, vector<2x7x256xf32>
    tpu.vector_store %arg5[%c0_10, %c0_11, %c0_12], %24 {strides = array<i32>} : memref<2x7x256xf32, #tpu.memory_space<vmem>>, vector<2x7x256xf32>,
    return
  }
  func.func @transform_0(%arg0: i32, %arg1: i32) -> (i32, i32, i32) {
    %c0_i32 = arith.constant 0 : i32
    %c0_i32_0 = arith.constant 0 : i32
    return %arg0, %c0_i32, %arg1 : i32, i32, i32
  }
  func.func @transform_1(%arg0: i32, %arg1: i32) -> (i32, i32) {
    %c0_i32 = arith.constant 0 : i32
    %c0_i32_0 = arith.constant 0 : i32
    %c0_i32_1 = arith.constant 0 : i32
    return %c0_i32, %c0_i32_0 : i32, i32
  }
  func.func @transform_2(%arg0: i32, %arg1: i32) -> (i32, i32) {
    %c0_i32 = arith.constant 0 : i32
    %c0_i32_0 = arith.constant 0 : i32
    %c0_i32_1 = arith.constant 0 : i32
    return %c0_i32, %c0_i32_0 : i32, i32
  }
  func.func @transform_3(%arg0: i32, %arg1: i32) -> (i32, i32, i32) {
    %c0_i32 = arith.constant 0 : i32
    %c0_i32_0 = arith.constant 0 : i32
    return %arg0, %c0_i32, %arg1 : i32, i32, i32
  }
}

</mosaic_0001>

<llo_original>
// kernel: tpu_custom_call.1
$region0: #{tpu_custom_call.1}
  #allocation0 [shape = 'u32[]', space=smem, size = 0x4, offset = 0x4, fixed_abs, tag = 'smem constant byte address 0x4 - core index']
  #allocation1 [shape = 'u32[144,128]{1,0:T(1,128)}', space=vmem, size = 0x12000, scoped, tag = 'internal scratch']
  %s0 = inlined_call_operand.vmem [shape: f32[2,7,256], index: 0, kind: input, shape index: {}]
  %s1 = inlined_call_operand.vmem [shape: f32[7,1], index: 1, kind: input, shape index: {}]
  %s2 = inlined_call_operand.vmem [shape: f32[7,1], index: 2, kind: input, shape index: {}]
  %s3 = inlined_call_operand.vmem [shape: f32[2,7,256], index: 3, kind: output, shape index: {}]
  %s4 = sld [smem:[#allocation0]]
  $region22: #{tpu_custom_call.1} parent=0
    _
  %s6 = ssub.s32 1, %s4
  %s7 = scalar_select 0, %s6, %s4
  // Predicated region
  $region2: #{tpu_custom_call.1} parent=0 // pred_check
    _
  $region3: #{tpu_custom_call.1} parent=0 // pred_check_branch
    %9 = sbr.rel (0) target = $region5
  $region4: #{tpu_custom_call.1} parent=0 // pred_region
    _
  $region5: #{tpu_custom_call.1} parent=0 // pred_fallthru
    _
  // Predicated region
  $region6: #{tpu_custom_call.1} parent=0 // pred_check
    _
  $region7: #{tpu_custom_call.1} parent=0 // pred_check_branch
    %11 = sbr.rel (0) target = $region9
  $region8: #{tpu_custom_call.1} parent=0 // pred_region
    _
  $region9: #{tpu_custom_call.1} parent=0 // pred_fallthru
    _
  // Predicated region
  $region10: #{tpu_custom_call.1} parent=0 // pred_check
    _
  $region11: #{tpu_custom_call.1} parent=0 // pred_check_branch
    %13 = sbr.rel (0) target = $region13
  $region12: #{tpu_custom_call.1} parent=0 // pred_region
    _
  $region13: #{tpu_custom_call.1} parent=0 // pred_fallthru
    _
  %v14 = vld [vmem:[%s0] sm:$0x7f]
  %v15 = vld [vmem:[%s0 + $0x8] sm:$0x7f]
  %v16 = vld [vmem:[%s0 + $0x10] sm:$0x7f]
  %v17 = vld [vmem:[%s0 + $0x18] sm:$0x7f]
  %vm18 = vcmask 1046528
  %v19 = vsel %vm18, %v14, 0.0
  %v20 = vrot.slane %v19, 4
  %v21 = vadd.f32 %v19, %v20
  %v22 = vrot.slane %v21, 2
  %v23 = vadd.f32 %v21, %v22
  %v24 = vrot.slane %v23, 1
  %v25 = vadd.f32 %v23, %v24
  %v26 = vsel %vm18, %v15, 0.0
  %v27 = vrot.slane %v26, 4
  %v28 = vadd.f32 %v26, %v27
  %v29 = vrot.slane %v28, 2
  %v30 = vadd.f32 %v28, %v29
  %v31 = vrot.slane %v30, 1
  %v32 = vadd.f32 %v30, %v31
  %v33 = vsel %vm18, %v16, 0.0
  %v34 = vrot.slane %v33, 4
  %v35 = vadd.f32 %v33, %v34
  %v36 = vrot.slane %v35, 2
  %v37 = vadd.f32 %v35, %v36
  %v38 = vrot.slane %v37, 1
  %v39 = vadd.f32 %v37, %v38
  %v40 = vsel %vm18, %v17, 0.0
  %v41 = vrot.slane %v40, 4
  %v42 = vadd.f32 %v40, %v41
  %v43 = vrot.slane %v42, 2
  %v44 = vadd.f32 %v42, %v43
  %v45 = vrot.slane %v44, 1
  %v46 = vadd.f32 %v44, %v45
  %v47 = vrcp.pop 7.0
  %v48 = vmul.f32 %v25, %v47
  %v49 = vmul.f32 %v32, %v47
  %v50 = vmul.f32 %v39, %v47
  %v51 = vmul.f32 %v46, %v47
  %v52 = vsub.f32 %v14, %v48
  %v53 = vsub.f32 %v15, %v49
  %v54 = vsub.f32 %v16, %v50
  %v55 = vsub.f32 %v17, %v51
  %v56 = vmul.f32 %v52, %v52
  %v57 = vmul.f32 %v53, %v53
  %v58 = vmul.f32 %v54, %v54
  %v59 = vmul.f32 %v55, %v55
  %v60 = vsel %vm18, %v56, 0.0
  %v61 = vrot.slane %v60, 4
  %v62 = vadd.f32 %v60, %v61
  %v63 = vrot.slane %v62, 2
  %v64 = vadd.f32 %v62, %v63
  %v65 = vrot.slane %v64, 1
  %v66 = vadd.f32 %v64, %v65
  %v67 = vsel %vm18, %v57, 0.0
  %v68 = vrot.slane %v67, 4
  %v69 = vadd.f32 %v67, %v68
  %v70 = vrot.slane %v69, 2
  %v71 = vadd.f32 %v69, %v70
  %v72 = vrot.slane %v71, 1
  %v73 = vadd.f32 %v71, %v72
  %v74 = vsel %vm18, %v58, 0.0
  %v75 = vrot.slane %v74, 4
  %v76 = vadd.f32 %v74, %v75
  %v77 = vrot.slane %v76, 2
  %v78 = vadd.f32 %v76, %v77
  %v79 = vrot.slane %v78, 1
  %v80 = vadd.f32 %v78, %v79
  %v81 = vsel %vm18, %v59, 0.0
  %v82 = vrot.slane %v81, 4
  %v83 = vadd.f32 %v81, %v82
  %v84 = vrot.slane %v83, 2
  %v85 = vadd.f32 %v83, %v84
  %v86 = vrot.slane %v85, 1
  %v87 = vadd.f32 %v85, %v86
  %v88 = vmul.f32 %v66, %v47
  %v89 = vmul.f32 %v73, %v47
  %v90 = vmul.f32 %v80, %v47
  %v91 = vmul.f32 %v87, %v47
  %v92 = vadd.f32 %v88, 1e-06
  %v93 = vadd.f32 %v89, 1e-06
  %v94 = vadd.f32 %v90, 1e-06
  %v95 = vadd.f32 %v91, 1e-06
  %v96 = vrsqrt.pop %v92
  %v97 = vrsqrt.pop %v93
  %v98 = vrsqrt.pop %v94
  %v99 = vrsqrt.pop %v95
  %v100 = vld [vmem:[%s1] sm:$0x7f]
  %v101 = vmul.f32 %v52, %v96
  %v102 = vmul.f32 %v53, %v97
  %v103 = vmul.f32 %v54, %v98
  %v104 = vmul.f32 %v55, %v99
  %106 = vset.pattern.permute.xlu0 0
  %107 = vperm.xlu0 %106, %v100
  %v108 = vpop.permute.xlu0 %107
  %v110 = vmul.f32 %v108, %v101
  %v111 = vmul.f32 %v108, %v102
  %v112 = vmul.f32 %v108, %v103
  %v113 = vmul.f32 %v108, %v104
  %v114 = vld [vmem:[%s2] sm:$0x7f]
  %116 = vset.pattern.permute.xlu0 0
  %117 = vperm.xlu0 %116, %v114
  %v118 = vpop.permute.xlu0 %117
  %v120 = vadd.f32 %v110, %v118
  %v121 = vadd.f32 %v111, %v118
  %v122 = vadd.f32 %v112, %v118
  %v123 = vadd.f32 %v113, %v118
  %124 = vst [vmem:[%s3] sm:$0x7f] %v120
  %125 = vst [vmem:[%s3 + $0x8] sm:$0x7f] %v121
  %126 = vst [vmem:[%s3 + $0x10] sm:$0x7f] %v122
  %127 = vst [vmem:[%s3 + $0x18] sm:$0x7f] %v123
  // Predicated region
  $region14: #{tpu_custom_call.1} parent=0 // pred_check
    _
  $region15: #{tpu_custom_call.1} parent=0 // pred_check_branch
    %129 = sbr.rel (0) target = $region17
  $region16: #{tpu_custom_call.1} parent=0 // pred_region
    _
  $region17: #{tpu_custom_call.1} parent=0 // pred_fallthru
    _
  // Predicated region
  $region18: #{tpu_custom_call.1} parent=0 // pred_check
    _
  $region19: #{tpu_custom_call.1} parent=0 // pred_check_branch
    %131 = sbr.rel (0) target = $region21
  $region20: #{tpu_custom_call.1} parent=0 // pred_region
    _
  $region21: #{tpu_custom_call.1} parent=0 // pred_fallthru
    _

</llo_original>
